<compile_context>
chip_gen: v6e
topology: v6e:2x2x1
jax: 0.10.0
libtpu: 0.0.40
codegen_flags: <defaults>
</compile_context>

<pallas_src>
import functools

import jax
import jax.numpy as jnp
from jax.experimental import pallas as pl
from jax.experimental.pallas import tpu as pltpu


def _round_up(x, m):
    return (x + m - 1) // m * m


def _default_epilogue_dtype():
    """bf16 epilogue on chips with a bf16 VPU (v6e/v7x); f32 on older parts."""
    try:
        kind = jax.devices()[0].device_kind.lower()
    except Exception:  # pragma: no cover - defensive
        kind = ""
    if any(tag in kind for tag in ("v2", "v3", "v4", "v5")):
        return jnp.float32
    return jnp.bfloat16


def discriminator_kernel(
    x_ref,                      # (K, TILE_B)  f32, batch on lanes
    w1_ref, b1_ref,             # (H, K) f32, (H, 1) f32
    w2_ref, b2_ref,             # (2H, H) mxu_dtype, (2H, 1) f32
    w3_ref, b3_ref,             # (H, 2H) mxu_dtype, (H, 1) f32
    w4_ref, b4_ref,             # (1, H) mxu_dtype, (1, 1) f32
    o_ref,                      # (1, TILE_B) f32
    *,
    epilogue_dtype,
):
    f32 = jnp.float32
    epi = epilogue_dtype
    mxu_dt = w2_ref.dtype       # bf16 (default) or f32

    x = x_ref[...].astype(f32)                    # (K, TILE_B)
    k_in = x.shape[0]

    # --- Layer 1: Linear(K -> H).  K is tiny (2): VPU broadcast-FMAs in f32
    #     instead of wasting an MXU pass on a 2-deep contraction.
    if k_in <= 8:
        w1 = w1_ref[...].astype(f32)              # (H, K)
        h = w1[:, 0:1] * x[0:1, :]                # (H, TILE_B)
        for k in range(1, k_in):                  # static unroll, K tiny
            h = h + w1[:, k:k + 1] * x[k:k + 1, :]
    else:
        h = jnp.dot(w1_ref[...].astype(mxu_dt), x.astype(mxu_dt),
                    preferred_element_type=f32)
    h = h + b1_ref[...].astype(f32)               # (H,1) broadcast over lanes
    h = jnp.maximum(h, 0.2 * h)                   # LeakyReLU(0.2)
    h = h.astype(mxu_dt)
    # Dropout(0.3): identity (eval mode).

    # --- Layer 2: Linear(H -> 2H) on the MXU (bf16 feed, f32 accumulate).
    h = jnp.dot(w2_ref[...], h, preferred_element_type=f32)   # (2H, TILE_B)
    h = h.astype(epi) + b2_ref[...].astype(epi)
    h = jnp.maximum(h, 0.2 * h).astype(mxu_dt)

    # --- Layer 3: Linear(2H -> H) on the MXU.
    h = jnp.dot(w3_ref[...], h, preferred_element_type=f32)   # (H, TILE_B)
    h = h.astype(epi) + b3_ref[...].astype(epi)
    h = jnp.maximum(h, 0.2 * h).astype(mxu_dt)

    # --- Layer 4: Linear(H -> 1) + Sigmoid.  (1,H)@(H,TILE_B) -> (1,TILE_B)
    #     lane-dense logits -> unmasked output store.
    logits = jnp.dot(w4_ref[...], h, preferred_element_type=f32)
    logits = logits + b4_ref[...].astype(f32)     # (1,1) broadcast
    o_ref[...] = jax.nn.sigmoid(logits).astype(o_ref.dtype)


@functools.partial(jax.jit,
                   static_argnames=("tile_b", "mxu_dtype", "epilogue_dtype"))
def _discriminator_forward(x, params, *, tile_b, mxu_dtype, epilogue_dtype):
    (w1, b1), (w2, b2), (w3, b3), (w4, b4) = params
    batch, input_size = x.shape

    # ---- Batch tile selection (batch lives on lanes -> 128-aligned tiles) ----
    tile_b = max(128, _round_up(tile_b, 128))
    padded128 = _round_up(batch, 128)
    if padded128 <= tile_b:
        # Small/medium batch: single tile, unless it splits cleanly into two
        # equal 128-aligned tiles (keeps both v7x TensorCores busy).
        if padded128 >= 512 and padded128 % 256 == 0:
            tile_b = padded128 // 2
        else:
            tile_b = padded128
    padded = _round_up(batch, tile_b)
    num_tiles = padded // tile_b

    # ---- Feature-major / batch-on-lanes input layout ----
    xt = x.T                                           # (input_size, batch)
    if padded != batch:
        xt = jnp.pad(xt, ((0, 0), (0, padded - batch)))

    # ---- Weights: PyTorch (out, in) layout.  Pre-cast the MXU-fed ones once
    #      in the wrapper; keep w1 (VPU path) and all biases in f32. ----
    f32 = jnp.float32
    w1p = w1.astype(f32)
    w2p = w2.astype(mxu_dtype)
    w3p = w3.astype(mxu_dtype)
    w4p = w4.astype(mxu_dtype)
    b1p = b1.reshape(-1, 1).astype(f32)
    b2p = b2.reshape(-1, 1).astype(f32)
    b3p = b3.reshape(-1, 1).astype(f32)
    b4p = b4.reshape(-1, 1).astype(f32)
    weight_ops = (w1p, b1p, w2p, b2p, w3p, b3p, w4p, b4p)

    # Constant index maps -> weights DMA'd once, VMEM-resident for all steps.
    full = lambda a: pl.BlockSpec(a.shape, lambda i: (0,) * a.ndim)

    out = pl.pallas_call(
        functools.partial(discriminator_kernel, epilogue_dtype=epilogue_dtype),
        out_shape=jax.ShapeDtypeStruct((1, padded), jnp.float32),
        grid=(num_tiles,),
        in_specs=[pl.BlockSpec((input_size, tile_b), lambda i: (0, i))]
                 + [full(a) for a in weight_ops],
        out_specs=pl.BlockSpec((1, tile_b), lambda i: (0, i)),
        compiler_params=pltpu.CompilerParams(
            dimension_semantics=("parallel",),   # batch tiles across v7x's 2 TCs
            # 32 MiB works on all generations (v7x scoped default); v5e/v6e can
            # raise this and tile_b (e.g. 8192) for even fewer grid steps.
            vmem_limit_bytes=32 << 20,
        ),
    )(xt, *weight_ops)

    # (1, padded) row-major == (padded, 1) row-major: free reshape, drop pad.
    return out.reshape(padded, 1)[:batch]


def discriminator_forward(x, params, *, tile_b=4096, mxu_dtype=jnp.bfloat16,
                          epilogue_dtype=None):
    """Fused forward pass.  Returns probabilities of shape (batch, 1)."""
    if epilogue_dtype is None:
        epilogue_dtype = (jnp.float32 if mxu_dtype == jnp.float32
                          else _default_epilogue_dtype())
    return _discriminator_forward(x, params, tile_b=tile_b,
                                  mxu_dtype=mxu_dtype,
                                  epilogue_dtype=epilogue_dtype)


def init_discriminator_params(key, input_size=2, hidden_size=128):
    """PyTorch-style nn.Linear init; weights in PyTorch (out, in) layout."""
    dims = [
        (input_size, hidden_size),
        (hidden_size, hidden_size * 2),
        (hidden_size * 2, hidden_size),
        (hidden_size, 1),
    ]
    params = []
    for fan_in, fan_out in dims:
        key, wk, bk = jax.random.split(key, 3)
        bound = 1.0 / (fan_in ** 0.5)
        w = jax.random.uniform(wk, (fan_out, fan_in), jnp.float32, -bound, bound)
        b = jax.random.uniform(bk, (fan_out,), jnp.float32, -bound, bound)
        params.append((w, b))
    return params


def discriminator_reference(x, params):
    """Pure-JAX reference for correctness check."""
    h = x
    for i, (w, b) in enumerate(params):
        h = h @ w.T + b
        if i < len(params) - 1:
            h = jnp.where(h > 0, h, 0.2 * h)
    return jax.nn.sigmoid(h)


if __name__ == "__main__":
    key = jax.random.PRNGKey(0)
    key, xk, pk = jax.random.split(key, 3)

    # Small shapes consistent with the module: 2-D data points, hidden=32.
    batch, input_size, hidden_size = 300, 2, 32
    x = jax.random.normal(xk, (batch, input_size), jnp.float32)
    params = init_discriminator_params(pk, input_size=input_size,
                                       hidden_size=hidden_size)

    ref = discriminator_reference(x, params)

    # f32 MXU path on a multi-tile grid (tile_b=128 -> 3 batch tiles + pad):
    # exercises the pipelined grid and checks tight numerics.
    out_f32 = jax.block_until_ready(
        discriminator_forward(x, params, tile_b=128, mxu_dtype=jnp.float32))
    assert out_f32.shape == (batch, 1), out_f32.shape
    assert jnp.allclose(out_f32, ref, atol=1e-4, rtol=1e-4), \
        float(jnp.max(jnp.abs(out_f32 - ref)))

    # Default fast path: bf16-fed MXU, big single tile.
    out_bf16 = jax.block_until_ready(discriminator_forward(x, params))
    assert out_bf16.shape == (batch, 1), out_bf16.shape
    assert jnp.allclose(out_bf16, ref, atol=3e-2, rtol=3e-2), \
        float(jnp.max(jnp.abs(out_bf16 - ref)))

    print("KERNEL_OK")
</pallas_src>

<mosaic_0001>
module attributes {stable_mosaic.version = 11 : i64} {
  func.func @discriminator_kernel(%arg0: i32, %arg1: memref<2x128xf32, #tpu.memory_space<vmem>>, %arg2: memref<32x2xf32, #tpu.memory_space<vmem>>, %arg3: memref<32x1xf32, #tpu.memory_space<vmem>>, %arg4: memref<64x32xf32, #tpu.memory_space<vmem>>, %arg5: memref<64x1xf32, #tpu.memory_space<vmem>>, %arg6: memref<32x64xf32, #tpu.memory_space<vmem>>, %arg7: memref<32x1xf32, #tpu.memory_space<vmem>>, %arg8: memref<1x32xf32, #tpu.memory_space<vmem>>, %arg9: memref<1x1xf32, #tpu.memory_space<vmem>>, %arg10: memref<1x128xf32, #tpu.memory_space<vmem>>) attributes {dimension_semantics = [#tpu.dimension_semantics<parallel>], iteration_bounds = array<i64: 3>, scalar_prefetch = 0 : i64, scratch_operands = 0 : i64, tpu.core_type = #tpu.core_type<tc>, window_params = [{transform_indices = @transform_0, window_bounds = array<i64: 2, 128>}, {pipeline_mode = #tpu.pipeline_mode<synchronous>, transform_indices = @transform_1, window_bounds = array<i64: 32, 2>}, {pipeline_mode = #tpu.pipeline_mode<synchronous>, transform_indices = @transform_2, window_bounds = array<i64: 32, 1>}, {pipeline_mode = #tpu.pipeline_mode<synchronous>, transform_indices = @transform_3, window_bounds = array<i64: 64, 32>}, {pipeline_mode = #tpu.pipeline_mode<synchronous>, transform_indices = @transform_4, window_bounds = array<i64: 64, 1>}, {pipeline_mode = #tpu.pipeline_mode<synchronous>, transform_indices = @transform_5, window_bounds = array<i64: 32, 64>}, {pipeline_mode = #tpu.pipeline_mode<synchronous>, transform_indices = @transform_6, window_bounds = array<i64: 32, 1>}, {pipeline_mode = #tpu.pipeline_mode<synchronous>, transform_indices = @transform_7, window_bounds = array<i64: 1, 32>}, {pipeline_mode = #tpu.pipeline_mode<synchronous>, transform_indices = @transform_8, window_bounds = array<i64: 1, 1>}, {transform_indices = @transform_9, window_bounds = array<i64: 1, 128>}]} {
    %c0 = arith.constant 0 : index
    %c0_0 = arith.constant 0 : index
    %0 = vector.load %arg1[%c0, %c0_0] : memref<2x128xf32, #tpu.memory_space<vmem>>, vector<2x128xf32>
    %c0_1 = arith.constant 0 : index
    %c0_2 = arith.constant 0 : index
    %1 = vector.load %arg2[%c0_1, %c0_2] : memref<32x2xf32, #tpu.memory_space<vmem>>, vector<32x2xf32>
    %2 = vector.extract_strided_slice %1 {offsets = [0, 0], sizes = [32, 1], strides = [1, 1]} : vector<32x2xf32> to vector<32x1xf32>
    %3 = vector.extract_strided_slice %0 {offsets = [0, 0], sizes = [1, 128], strides = [1, 1]} : vector<2x128xf32> to vector<1x128xf32>
    %4 = vector.broadcast %2 : vector<32x1xf32> to vector<32x128xf32>
    %5 = vector.broadcast %3 : vector<1x128xf32> to vector<32x128xf32>
    %6 = arith.mulf %4, %5 : vector<32x128xf32>
    %7 = vector.extract_strided_slice %1 {offsets = [0, 1], sizes = [32, 1], strides = [1, 1]} : vector<32x2xf32> to vector<32x1xf32>
    %8 = vector.extract_strided_slice %0 {offsets = [1, 0], sizes = [1, 128], strides = [1, 1]} : vector<2x128xf32> to vector<1x128xf32>
    %9 = vector.broadcast %7 : vector<32x1xf32> to vector<32x128xf32>
    %10 = vector.broadcast %8 : vector<1x128xf32> to vector<32x128xf32>
    %11 = arith.mulf %9, %10 : vector<32x128xf32>
    %12 = arith.addf %6, %11 : vector<32x128xf32>
    %c0_3 = arith.constant 0 : index
    %c0_4 = arith.constant 0 : index
    %13 = vector.load %arg3[%c0_3, %c0_4] : memref<32x1xf32, #tpu.memory_space<vmem>>, vector<32x1xf32>
    %14 = vector.broadcast %13 : vector<32x1xf32> to vector<32x128xf32>
    %15 = arith.addf %12, %14 : vector<32x128xf32>
    %cst = arith.constant 2.000000e-01 : f32
    %16 = vector.broadcast %cst : f32 to vector<32x128xf32>
    %17 = arith.mulf %16, %15 : vector<32x128xf32>
    %18 = arith.maximumf %15, %17 : vector<32x128xf32>
    %c0_5 = arith.constant 0 : index
    %c0_6 = arith.constant 0 : index
    %19 = vector.load %arg4[%c0_5, %c0_6] : memref<64x32xf32, #tpu.memory_space<vmem>>, vector<64x32xf32>
    %cst_7 = arith.constant dense<0.000000e+00> : vector<64x128xf32>
    %20 = tpu.matmul %19, %18, %cst_7 {dimension_numbers = #tpu.dot_dimension_numbers<[1], [0], [0], [1], [0, 0, 1, 1], [], []>} : vector<64x32xf32>, vector<32x128xf32>, vector<64x128xf32> -> vector<64x128xf32>
    %c0_8 = arith.constant 0 : index
    %c0_9 = arith.constant 0 : index
    %21 = vector.load %arg5[%c0_8, %c0_9] : memref<64x1xf32, #tpu.memory_space<vmem>>, vector<64x1xf32>
    %22 = vector.broadcast %21 : vector<64x1xf32> to vector<64x128xf32>
    %23 = arith.addf %20, %22 : vector<64x128xf32>
    %cst_10 = arith.constant 2.000000e-01 : f32
    %24 = vector.broadcast %cst_10 : f32 to vector<64x128xf32>
    %25 = arith.mulf %24, %23 : vector<64x128xf32>
    %26 = arith.maximumf %23, %25 : vector<64x128xf32>
    %c0_11 = arith.constant 0 : index
    %c0_12 = arith.constant 0 : index
    %27 = vector.load %arg6[%c0_11, %c0_12] : memref<32x64xf32, #tpu.memory_space<vmem>>, vector<32x64xf32>
    %cst_13 = arith.constant dense<0.000000e+00> : vector<32x128xf32>
    %28 = tpu.matmul %27, %26, %cst_13 {dimension_numbers = #tpu.dot_dimension_numbers<[1], [0], [0], [1], [0, 0, 1, 1], [], []>} : vector<32x64xf32>, vector<64x128xf32>, vector<32x128xf32> -> vector<32x128xf32>
    %c0_14 = arith.constant 0 : index
    %c0_15 = arith.constant 0 : index
    %29 = vector.load %arg7[%c0_14, %c0_15] : memref<32x1xf32, #tpu.memory_space<vmem>>, vector<32x1xf32>
    %30 = vector.broadcast %29 : vector<32x1xf32> to vector<32x128xf32>
    %31 = arith.addf %28, %30 : vector<32x128xf32>
    %cst_16 = arith.constant 2.000000e-01 : f32
    %32 = vector.broadcast %cst_16 : f32 to vector<32x128xf32>
    %33 = arith.mulf %32, %31 : vector<32x128xf32>
    %34 = arith.maximumf %31, %33 : vector<32x128xf32>
    %c0_17 = arith.constant 0 : index
    %c0_18 = arith.constant 0 : index
    %35 = vector.load %arg8[%c0_17, %c0_18] : memref<1x32xf32, #tpu.memory_space<vmem>>, vector<1x32xf32>
    %cst_19 = arith.constant dense<0.000000e+00> : vector<1x128xf32>
    %36 = tpu.matmul %35, %34, %cst_19 {dimension_numbers = #tpu.dot_dimension_numbers<[1], [0], [0], [1], [0, 0, 1, 1], [], []>} : vector<1x32xf32>, vector<32x128xf32>, vector<1x128xf32> -> vector<1x128xf32>
    %c0_20 = arith.constant 0 : index
    %c0_21 = arith.constant 0 : index
    %37 = vector.load %arg9[%c0_20, %c0_21] : memref<1x1xf32, #tpu.memory_space<vmem>>, vector<1x1xf32>
    %38 = vector.broadcast %37 : vector<1x1xf32> to vector<1x128xf32>
    %39 = arith.addf %36, %38 : vector<1x128xf32>
    %40 = arith.negf %39 : vector<1x128xf32>
    %41 = math.exp %40 : vector<1x128xf32>
    %cst_22 = arith.constant 1.000000e+00 : f32
    %42 = vector.broadcast %cst_22 : f32 to vector<1x128xf32>
    %43 = arith.addf %42, %41 : vector<1x128xf32>
    %44 = arith.divf %42, %43 : vector<1x128xf32>
    %c0_23 = arith.constant 0 : index
    %c0_24 = arith.constant 0 : index
    %45 = vector.load %arg10[%c0_23, %c0_24] : memref<1x128xf32, #tpu.memory_space<vmem>>, vector<1x128xf32>
    tpu.vector_store %arg10[%c0_23, %c0_24], %44 {strides = array<i32>} : memref<1x128xf32, #tpu.memory_space<vmem>>, vector<1x128xf32>,
    return
  }
  func.func @transform_0(%arg0: i32) -> (i32, i32) {
    %c0_i32 = arith.constant 0 : i32
    %c0_i32_0 = arith.constant 0 : i32
    return %c0_i32, %arg0 : i32, i32
  }
  func.func @transform_1(%arg0: i32) -> (i32, i32) {
    %c0_i32 = arith.constant 0 : i32
    %c0_i32_0 = arith.constant 0 : i32
    %c0_i32_1 = arith.constant 0 : i32
    return %c0_i32, %c0_i32_0 : i32, i32
  }
  func.func @transform_2(%arg0: i32) -> (i32, i32) {
    %c0_i32 = arith.constant 0 : i32
    %c0_i32_0 = arith.constant 0 : i32
    %c0_i32_1 = arith.constant 0 : i32
    return %c0_i32, %c0_i32_0 : i32, i32
  }
  func.func @transform_3(%arg0: i32) -> (i32, i32) {
    %c0_i32 = arith.constant 0 : i32
    %c0_i32_0 = arith.constant 0 : i32
    %c0_i32_1 = arith.constant 0 : i32
    return %c0_i32, %c0_i32_0 : i32, i32
  }
  func.func @transform_4(%arg0: i32) -> (i32, i32) {
    %c0_i32 = arith.constant 0 : i32
    %c0_i32_0 = arith.constant 0 : i32
    %c0_i32_1 = arith.constant 0 : i32
    return %c0_i32, %c0_i32_0 : i32, i32
  }
  func.func @transform_5(%arg0: i32) -> (i32, i32) {
    %c0_i32 = arith.constant 0 : i32
    %c0_i32_0 = arith.constant 0 : i32
    %c0_i32_1 = arith.constant 0 : i32
    return %c0_i32, %c0_i32_0 : i32, i32
  }
  func.func @transform_6(%arg0: i32) -> (i32, i32) {
    %c0_i32 = arith.constant 0 : i32
    %c0_i32_0 = arith.constant 0 : i32
    %c0_i32_1 = arith.constant 0 : i32
    return %c0_i32, %c0_i32_0 : i32, i32
  }
  func.func @transform_7(%arg0: i32) -> (i32, i32) {
    %c0_i32 = arith.constant 0 : i32
    %c0_i32_0 = arith.constant 0 : i32
    %c0_i32_1 = arith.constant 0 : i32
    return %c0_i32, %c0_i32_0 : i32, i32
  }
  func.func @transform_8(%arg0: i32) -> (i32, i32) {
    %c0_i32 = arith.constant 0 : i32
    %c0_i32_0 = arith.constant 0 : i32
    %c0_i32_1 = arith.constant 0 : i32
    return %c0_i32, %c0_i32_0 : i32, i32
  }
  func.func @transform_9(%arg0: i32) -> (i32, i32) {
    %c0_i32 = arith.constant 0 : i32
    %c0_i32_0 = arith.constant 0 : i32
    return %c0_i32, %arg0 : i32, i32
  }
}

</mosaic_0001>

<llo_original>
// kernel: _discriminator_forward.1
$region0: #{_discriminator_forward.1}
  #allocation0 [shape = 'u32[]', space=smem, size = 0x4, offset = 0x4, fixed_abs, tag = 'smem constant byte address 0x4 - core index']
  #allocation1 [shape = 'u32[144,128]{1,0:T(1,128)}', space=vmem, size = 0x12000, scoped, tag = 'internal scratch']
  #allocation2 [shape = 'f32[1,1]{1,0:T(1,128)S(1)}', space=vmem, size = 0x200, scoped, tag = 'scoped memory for _discriminator_forward.1']
  %s0 = inlined_call_operand.vmem [shape: f32[2,384], index: 0, kind: input, shape index: {}]
  %s1 = inlined_call_operand.vmem [shape: f32[32,2], index: 1, kind: input, shape index: {}]
  %s2 = inlined_call_operand.vmem [shape: f32[32,1], index: 2, kind: input, shape index: {}]
  %s3 = inlined_call_operand.vmem [shape: f32[64,32], index: 3, kind: input, shape index: {}]
  %s4 = inlined_call_operand.vmem [shape: f32[64,1], index: 4, kind: input, shape index: {}]
  %s5 = inlined_call_operand.vmem [shape: f32[32,64], index: 5, kind: input, shape index: {}]
  %s6 = inlined_call_operand.vmem [shape: f32[32,1], index: 6, kind: input, shape index: {}]
  %s7 = inlined_call_operand.vmem [shape: f32[1,32], index: 7, kind: input, shape index: {}]
  %s8 = inlined_call_operand.<no memory space> [shape: f32[1,1], index: 8, kind: input, shape index: {}]
  %s9 = inlined_call_operand.vmem [shape: f32[1,384], index: 9, kind: output, shape index: {}]
  %s10 = sld [smem:[#allocation0]]
  $region69: #{_discriminator_forward.1} parent=0
    _
  %s12 = ssub.s32 1, %s10
  %s13 = scalar_select 0, %s12, %s10
  %v14 = vstv %s8
  %15 = vst [vmem:[#allocation2] sm:$0x1] %v14
  loop: start=0, step=1, limit=5
  $region2: #{_discriminator_forward.1} parent=0 // loop_pre_header
    _
  $region3: #{_discriminator_forward.1} parent=0 // loop_header
    %s17 = sphi 0, %s21
    %p18 = scmp.ge.s32.totalorder %s17, 5
    %s27 = sphi 0, %s29
    %s30 = sphi 0, %s27
    %s31 = sphi 0, %s30
    %s47 = sphi 0, %s31
    %s51 = sphi 0, %s51
    %s53 = sphi 0, %s51
    %s54 = sphi 0, %s53
    %s68 = sphi 0, %s54
    %s72 = sphi 0, %s72
    %s74 = sphi 0, %s72
    %s75 = sphi 0, %s74
    %s89 = sphi 0, %s75
    %s93 = sphi 0, %s93
    %s95 = sphi 0, %s93
    %s96 = sphi 0, %s95
    %s110 = sphi 0, %s96
    %s114 = sphi 0, %s114
    %s116 = sphi 0, %s114
    %s117 = sphi 0, %s116
    %s131 = sphi 0, %s117
    %s135 = sphi 0, %s135
    %s137 = sphi 0, %s135
    %s138 = sphi 0, %s137
    %s152 = sphi 0, %s138
    %s156 = sphi 0, %s156
    %s158 = sphi 0, %s156
    %s159 = sphi 0, %s158
    %s173 = sphi 0, %s159
    %s177 = sphi 0, %s177
    %s179 = sphi 0, %s177
    %s180 = sphi 0, %s179
    %s194 = sphi 0, %s180
    %s198 = sphi 0, %s198
    %s200 = sphi 0, %s198
    %s201 = sphi 0, %s200
    %s215 = sphi 0, %s201
    %s221 = sphi 0, %s223
    %s224 = sphi 0, %s221
    %s225 = sphi 0, %s224
    %s241 = sphi 0, %s225
  $region4: #{_discriminator_forward.1} parent=0 // loop_header_branch
    %20 = sbr.rel (%p18) target = $region8
  $region5: #{_discriminator_forward.1} parent=0 // loop_body
    %s22 = ssub.s32 %s17, 1
    %s23 = ssub.s32 %s17, 2
    %s24 = sadd.s32 %s17, 1
    %s25 = ssub.s32 %s17, %s24
    %p26 = scmp.eq.s32.totalorder %s25, 0
    %s28 = sadd.s32 %s27, 1
    %s29 = scalar_select %p26, %s27, %s28
    %p32 = pneg %p26
    %p33 = scmp.eq.s32.totalorder %s17, 2
    %p34 = por %p32, %p33
    %p35 = scmp.ne.s32.totalorder %s27, %s30
    %p36 = scmp.eq.s32.totalorder %s17, 0
    %p37 = por %p35, %p36
    %p38 = scmp.ne.s32.totalorder %s27, %s30
    %p39 = scmp.eq.s32.totalorder %s22, 2
    %p40 = por %p38, %p39
    %p41 = scmp.ne.s32.totalorder %s30, %s31
    %p42 = scmp.eq.s32.totalorder %s22, 0
    %p43 = por %p41, %p42
    %p44 = scmp.ne.s32.totalorder %s30, %s31
    %p45 = scmp.eq.s32.totalorder %s23, 2
    %p46 = por %p44, %p45
    %p48 = scmp.ne.s32.totalorder %s31, %s47
    %p49 = scmp.eq.s32.totalorder %s23, 0
    %p50 = por %p48, %p49
    %s52 = sadd.s32 %s51, 1
    %p55 = scmp.eq.s32.totalorder %s17, 2
    %p56 = scmp.ne.s32.totalorder %s51, %s53
    %p57 = scmp.eq.s32.totalorder %s17, 0
    %p58 = por %p56, %p57
    %p59 = scmp.ne.s32.totalorder %s51, %s53
    %p60 = scmp.eq.s32.totalorder %s22, 2
    %p61 = por %p59, %p60
    %p62 = scmp.ne.s32.totalorder %s53, %s54
    %p63 = scmp.eq.s32.totalorder %s22, 0
    %p64 = por %p62, %p63
    %p65 = scmp.ne.s32.totalorder %s53, %s54
    %p66 = scmp.eq.s32.totalorder %s23, 2
    %p67 = por %p65, %p66
    %p69 = scmp.ne.s32.totalorder %s54, %s68
    %p70 = scmp.eq.s32.totalorder %s23, 0
    %p71 = por %p69, %p70
    %s73 = sadd.s32 %s72, 1
    %p76 = scmp.eq.s32.totalorder %s17, 2
    %p77 = scmp.ne.s32.totalorder %s72, %s74
    %p78 = scmp.eq.s32.totalorder %s17, 0
    %p79 = por %p77, %p78
    %p80 = scmp.ne.s32.totalorder %s72, %s74
    %p81 = scmp.eq.s32.totalorder %s22, 2
    %p82 = por %p80, %p81
    %p83 = scmp.ne.s32.totalorder %s74, %s75
    %p84 = scmp.eq.s32.totalorder %s22, 0
    %p85 = por %p83, %p84
    %p86 = scmp.ne.s32.totalorder %s74, %s75
    %p87 = scmp.eq.s32.totalorder %s23, 2
    %p88 = por %p86, %p87
    %p90 = scmp.ne.s32.totalorder %s75, %s89
    %p91 = scmp.eq.s32.totalorder %s23, 0
    %p92 = por %p90, %p91
    %s94 = sadd.s32 %s93, 1
    %p97 = scmp.eq.s32.totalorder %s17, 2
    %p98 = scmp.ne.s32.totalorder %s93, %s95
    %p99 = scmp.eq.s32.totalorder %s17, 0
    %p100 = por %p98, %p99
    %p101 = scmp.ne.s32.totalorder %s93, %s95
    %p102 = scmp.eq.s32.totalorder %s22, 2
    %p103 = por %p101, %p102
    %p104 = scmp.ne.s32.totalorder %s95, %s96
    %p105 = scmp.eq.s32.totalorder %s22, 0
    %p106 = por %p104, %p105
    %p107 = scmp.ne.s32.totalorder %s95, %s96
    %p108 = scmp.eq.s32.totalorder %s23, 2
    %p109 = por %p107, %p108
    %p111 = scmp.ne.s32.totalorder %s96, %s110
    %p112 = scmp.eq.s32.totalorder %s23, 0
    %p113 = por %p111, %p112
    %s115 = sadd.s32 %s114, 1
    %p118 = scmp.eq.s32.totalorder %s17, 2
    %p119 = scmp.ne.s32.totalorder %s114, %s116
    %p120 = scmp.eq.s32.totalorder %s17, 0
    %p121 = por %p119, %p120
    %p122 = scmp.ne.s32.totalorder %s114, %s116
    %p123 = scmp.eq.s32.totalorder %s22, 2
    %p124 = por %p122, %p123
    %p125 = scmp.ne.s32.totalorder %s116, %s117
    %p126 = scmp.eq.s32.totalorder %s22, 0
    %p127 = por %p125, %p126
    %p128 = scmp.ne.s32.totalorder %s116, %s117
    %p129 = scmp.eq.s32.totalorder %s23, 2
    %p130 = por %p128, %p129
    %p132 = scmp.ne.s32.totalorder %s117, %s131
    %p133 = scmp.eq.s32.totalorder %s23, 0
    %p134 = por %p132, %p133
    %s136 = sadd.s32 %s135, 1
    %p139 = scmp.eq.s32.totalorder %s17, 2
    %p140 = scmp.ne.s32.totalorder %s135, %s137
    %p141 = scmp.eq.s32.totalorder %s17, 0
    %p142 = por %p140, %p141
    %p143 = scmp.ne.s32.totalorder %s135, %s137
    %p144 = scmp.eq.s32.totalorder %s22, 2
    %p145 = por %p143, %p144
    %p146 = scmp.ne.s32.totalorder %s137, %s138
    %p147 = scmp.eq.s32.totalorder %s22, 0
    %p148 = por %p146, %p147
    %p149 = scmp.ne.s32.totalorder %s137, %s138
    %p150 = scmp.eq.s32.totalorder %s23, 2
    %p151 = por %p149, %p150
    %p153 = scmp.ne.s32.totalorder %s138, %s152
    %p154 = scmp.eq.s32.totalorder %s23, 0
    %p155 = por %p153, %p154
    %s157 = sadd.s32 %s156, 1
    %p160 = scmp.eq.s32.totalorder %s17, 2
    %p161 = scmp.ne.s32.totalorder %s156, %s158
    %p162 = scmp.eq.s32.totalorder %s17, 0
    %p163 = por %p161, %p162
    %p164 = scmp.ne.s32.totalorder %s156, %s158
    %p165 = scmp.eq.s32.totalorder %s22, 2
    %p166 = por %p164, %p165
    %p167 = scmp.ne.s32.totalorder %s158, %s159
    %p168 = scmp.eq.s32.totalorder %s22, 0
    %p169 = por %p167, %p168
    %p170 = scmp.ne.s32.totalorder %s158, %s159
    %p171 = scmp.eq.s32.totalorder %s23, 2
    %p172 = por %p170, %p171
    %p174 = scmp.ne.s32.totalorder %s159, %s173
    %p175 = scmp.eq.s32.totalorder %s23, 0
    %p176 = por %p174, %p175
    %s178 = sadd.s32 %s177, 1
    %p181 = scmp.eq.s32.totalorder %s17, 2
    %p182 = scmp.ne.s32.totalorder %s177, %s179
    %p183 = scmp.eq.s32.totalorder %s17, 0
    %p184 = por %p182, %p183
    %p185 = scmp.ne.s32.totalorder %s177, %s179
    %p186 = scmp.eq.s32.totalorder %s22, 2
    %p187 = por %p185, %p186
    %p188 = scmp.ne.s32.totalorder %s179, %s180
    %p189 = scmp.eq.s32.totalorder %s22, 0
    %p190 = por %p188, %p189
    %p191 = scmp.ne.s32.totalorder %s179, %s180
    %p192 = scmp.eq.s32.totalorder %s23, 2
    %p193 = por %p191, %p192
    %p195 = scmp.ne.s32.totalorder %s180, %s194
    %p196 = scmp.eq.s32.totalorder %s23, 0
    %p197 = por %p195, %p196
    %s199 = sadd.s32 %s198, 1
    %p202 = scmp.eq.s32.totalorder %s17, 2
    %p203 = scmp.ne.s32.totalorder %s198, %s200
    %p204 = scmp.eq.s32.totalorder %s17, 0
    %p205 = por %p203, %p204
    %p206 = scmp.ne.s32.totalorder %s198, %s200
    %p207 = scmp.eq.s32.totalorder %s22, 2
    %p208 = por %p206, %p207
    %p209 = scmp.ne.s32.totalorder %s200, %s201
    %p210 = scmp.eq.s32.totalorder %s22, 0
    %p211 = por %p209, %p210
    %p212 = scmp.ne.s32.totalorder %s200, %s201
    %p213 = scmp.eq.s32.totalorder %s23, 2
    %p214 = por %p212, %p213
    %p216 = scmp.ne.s32.totalorder %s201, %s215
    %p217 = scmp.eq.s32.totalorder %s23, 0
    %p218 = por %p216, %p217
    %s219 = ssub.s32 %s17, %s24
    %p220 = scmp.eq.s32.totalorder %s219, 0
    %s222 = sadd.s32 %s221, 1
    %s223 = scalar_select %p220, %s221, %s222
    %p226 = pneg %p220
    %p227 = scmp.eq.s32.totalorder %s17, 2
    %p228 = por %p226, %p227
    %p229 = scmp.ne.s32.totalorder %s221, %s224
    %p230 = scmp.eq.s32.totalorder %s17, 0
    %p231 = por %p229, %p230
    %p232 = scmp.ne.s32.totalorder %s221, %s224
    %p233 = scmp.eq.s32.totalorder %s22, 2
    %p234 = por %p232, %p233
    %p235 = scmp.ne.s32.totalorder %s224, %s225
    %p236 = scmp.eq.s32.totalorder %s22, 0
    %p237 = por %p235, %p236
    %p238 = scmp.ne.s32.totalorder %s224, %s225
    %p239 = scmp.eq.s32.totalorder %s23, 2
    %p240 = por %p238, %p239
    %p242 = scmp.ne.s32.totalorder %s225, %s241
    %p243 = scmp.eq.s32.totalorder %s23, 0
    %p244 = por %p242, %p243
    %p245 = scmp.le.s32.totalorder 1, %s17
    %p246 = scmp.lt.s32.totalorder %s17, 4
    %p247 = pnand %p245, %p246
    %p248 = pneg %p247
    // Predicated region
    $region9: #{_discriminator_forward.1} parent=5 // pred_check
      _
    $region10: #{_discriminator_forward.1} parent=5 // pred_check_branch
      %250 = sbr.rel (%p247) target = $region12
    $region11: #{_discriminator_forward.1} parent=5 // pred_region
      %s251 = ssub.s32 %s17, 1
      // Predicated region
      $region13: #{_discriminator_forward.1} parent=11 // pred_check
        %p252 = pneg %p64
      $region14: #{_discriminator_forward.1} parent=11 // pred_check_branch
        %254 = sbr.rel (%p252) target = $region16
      $region15: #{_discriminator_forward.1} parent=11 // pred_region
        _
      $region16: #{_discriminator_forward.1} parent=11 // pred_fallthru
        _
      // Predicated region
      $region17: #{_discriminator_forward.1} parent=11 // pred_check
        %p255 = pneg %p85
      $region18: #{_discriminator_forward.1} parent=11 // pred_check_branch
        %257 = sbr.rel (%p255) target = $region20
      $region19: #{_discriminator_forward.1} parent=11 // pred_region
        _
      $region20: #{_discriminator_forward.1} parent=11 // pred_fallthru
        _
      // Predicated region
      $region21: #{_discriminator_forward.1} parent=11 // pred_check
        %p258 = pneg %p106
      $region22: #{_discriminator_forward.1} parent=11 // pred_check_branch
        %260 = sbr.rel (%p258) target = $region24
      $region23: #{_discriminator_forward.1} parent=11 // pred_region
        _
      $region24: #{_discriminator_forward.1} parent=11 // pred_fallthru
        _
      // Predicated region
      $region25: #{_discriminator_forward.1} parent=11 // pred_check
        %p261 = pneg %p127
      $region26: #{_discriminator_forward.1} parent=11 // pred_check_branch
        %263 = sbr.rel (%p261) target = $region28
      $region27: #{_discriminator_forward.1} parent=11 // pred_region
        _
      $region28: #{_discriminator_forward.1} parent=11 // pred_fallthru
        _
      // Predicated region
      $region29: #{_discriminator_forward.1} parent=11 // pred_check
        %p264 = pneg %p148
      $region30: #{_discriminator_forward.1} parent=11 // pred_check_branch
        %266 = sbr.rel (%p264) target = $region32
      $region31: #{_discriminator_forward.1} parent=11 // pred_region
        _
      $region32: #{_discriminator_forward.1} parent=11 // pred_fallthru
        _
      // Predicated region
      $region33: #{_discriminator_forward.1} parent=11 // pred_check
        %p267 = pneg %p169
      $region34: #{_discriminator_forward.1} parent=11 // pred_check_branch
        %269 = sbr.rel (%p267) target = $region36
      $region35: #{_discriminator_forward.1} parent=11 // pred_region
        _
      $region36: #{_discriminator_forward.1} parent=11 // pred_fallthru
        _
      // Predicated region
      $region37: #{_discriminator_forward.1} parent=11 // pred_check
        %p270 = pneg %p190
      $region38: #{_discriminator_forward.1} parent=11 // pred_check_branch
        %272 = sbr.rel (%p270) target = $region40
      $region39: #{_discriminator_forward.1} parent=11 // pred_region
        _
      $region40: #{_discriminator_forward.1} parent=11 // pred_fallthru
        _
      // Predicated region
      $region41: #{_discriminator_forward.1} parent=11 // pred_check
        %p273 = pneg %p211
      $region42: #{_discriminator_forward.1} parent=11 // pred_check_branch
        %275 = sbr.rel (%p273) target = $region44
      $region43: #{_discriminator_forward.1} parent=11 // pred_region
        _
      $region44: #{_discriminator_forward.1} parent=11 // pred_fallthru
        _
    $region12: #{_discriminator_forward.1} parent=5 // pred_fallthru
      _
    %p276 = scmp.lt.s32.totalorder %s17, 3
    // Predicated region
    $region45: #{_discriminator_forward.1} parent=5 // pred_check
      %p277 = pneg %p276
    $region46: #{_discriminator_forward.1} parent=5 // pred_check_branch
      %279 = sbr.rel (%p277) target = $region48
    $region47: #{_discriminator_forward.1} parent=5 // pred_region
      // Predicated region
      $region49: #{_discriminator_forward.1} parent=47 // pred_check
        %p280 = pneg %p37
      $region50: #{_discriminator_forward.1} parent=47 // pred_check_branch
        %282 = sbr.rel (%p280) target = $region52
      $region51: #{_discriminator_forward.1} parent=47 // pred_region
        %p283 = scmp.lt.s32.totalorder %s17, 2
        %s284 = scalar_select %p283, %s17, 2
        %s285 = smul.addr %s284, 2
        %s286 = scalar_lea.vmem %s0, %s285
      $region52: #{_discriminator_forward.1} parent=47 // pred_fallthru
        _
    $region48: #{_discriminator_forward.1} parent=5 // pred_fallthru
      _
    %p287 = scmp.le.s32.totalorder 1, %s17
    %p288 = scmp.lt.s32.totalorder %s17, 4
    %p289 = pnand %p287, %p288
    %p290 = pneg %p289
    // Predicated region
    $region53: #{_discriminator_forward.1} parent=5 // pred_check
      _
    $region54: #{_discriminator_forward.1} parent=5 // pred_check_branch
      %292 = sbr.rel (%p289) target = $region56
    $region55: #{_discriminator_forward.1} parent=5 // pred_region
      %s293 = ssub.s32 %s17, 1
      %p294 = scmp.lt.s32.totalorder %s22, 2
      %s295 = scalar_select %p294, %s22, 2
      %s296 = smul.addr %s295, 2
      %s297 = scalar_lea.vmem %s0, %s296
      %p298 = pneg %p43
      %p299 = pneg %p40
      %p300 = pneg %p64
      %p301 = pneg %p61
      %p302 = pneg %p85
      %p303 = pneg %p82
      %p304 = pneg %p106
      %p305 = pneg %p103
      %p306 = pneg %p127
      %p307 = pneg %p124
      %p308 = pneg %p148
      %p309 = pneg %p145
      %p310 = pneg %p169
      %p311 = pneg %p166
      %p312 = pneg %p190
      %p313 = pneg %p187
      %p314 = pneg %p211
      %p315 = pneg %p208
      %p316 = pneg %p237
      %p317 = pneg %p234
      %p318 = scmp.lt.s32.totalorder %s22, 2
      %s319 = scalar_select %p318, %s22, 2
      %s320 = scalar_lea.vmem %s9, %s319
      %p321 = scmp.lt.s32.totalorder %s22, 2
      %s322 = scalar_select %p321, %s22, 2
      %s323 = smul.addr %s322, 2
      %s324 = scalar_lea.vmem %s0, %s323
      %p325 = scmp.lt.s32.totalorder %s22, 2
      %s326 = scalar_select %p325, %s22, 2
      %s327 = scalar_lea.vmem %s9, %s326
      %v328 = vld [vmem:[%s324] sm:$0x3]
      %v329 = vld [vmem:[%s1] sm:$0xff]
      %v330 = vld [vmem:[%s1 + $0x8] sm:$0xff]
      %v331 = vld [vmem:[%s1 + $0x10] sm:$0xff]
      %v332 = vld [vmem:[%s1 + $0x18] sm:$0xff]
      %334 = vset.pattern.permute.xlu0 0
      %335 = vperm.xlu0 %334, %v329
      %v336 = vpop.permute.xlu0 %335
      %339 = vset.pattern.permute.xlu0 0
      %340 = vperm.xlu0 %339, %v330
      %v341 = vpop.permute.xlu0 %340
      %344 = vset.pattern.permute.xlu0 0
      %345 = vperm.xlu0 %344, %v331
      %v346 = vpop.permute.xlu0 %345
      %349 = vset.pattern.permute.xlu0 0
      %350 = vperm.xlu0 %349, %v332
      %v351 = vpop.permute.xlu0 %350
      %v353 = vlaneseq
      %v354 = vshrl.u32 %v353, 7
      %v355 = vsub.s32 0, %v354
      %v356 = vrot.slane %v328, %v355
      %v357 = vmul.f32 %v336, %v356
      %v358 = vmul.f32 %v341, %v356
      %v359 = vmul.f32 %v346, %v356
      %v360 = vmul.f32 %v351, %v356
      %361 = vset.pattern.permute.xlu0 1
      %362 = vperm.xlu0 %361, %v329
      %v363 = vpop.permute.xlu0 %362
      %365 = vset.pattern.permute.xlu0 1
      %366 = vperm.xlu0 %365, %v330
      %v367 = vpop.permute.xlu0 %366
      %369 = vset.pattern.permute.xlu0 1
      %370 = vperm.xlu0 %369, %v331
      %v371 = vpop.permute.xlu0 %370
      %373 = vset.pattern.permute.xlu0 1
      %374 = vperm.xlu0 %373, %v332
      %v375 = vpop.permute.xlu0 %374
      %v377 = vlaneseq
      %v378 = vshrl.u32 %v377, 7
      %v379 = vsub.s32 1, %v378
      %v380 = vrot.slane %v328, %v379
      %v381 = vmul.f32 %v363, %v380
      %v382 = vmul.f32 %v367, %v380
      %v383 = vmul.f32 %v371, %v380
      %v384 = vmul.f32 %v375, %v380
      %v385 = vadd.f32 %v357, %v381
      %v386 = vadd.f32 %v358, %v382
      %v387 = vadd.f32 %v359, %v383
      %v388 = vadd.f32 %v360, %v384
      %v389 = vld [vmem:[%s2] sm:$0xff]
      %v390 = vld [vmem:[%s2 + $0x8] sm:$0xff]
      %v391 = vld [vmem:[%s2 + $0x10] sm:$0xff]
      %v392 = vld [vmem:[%s2 + $0x18] sm:$0xff]
      %394 = vset.pattern.permute.xlu0 0
      %395 = vperm.xlu0 %394, %v389
      %v396 = vpop.permute.xlu0 %395
      %399 = vset.pattern.permute.xlu0 0
      %400 = vperm.xlu0 %399, %v390
      %v401 = vpop.permute.xlu0 %400
      %404 = vset.pattern.permute.xlu0 0
      %405 = vperm.xlu0 %404, %v391
      %v406 = vpop.permute.xlu0 %405
      %409 = vset.pattern.permute.xlu0 0
      %410 = vperm.xlu0 %409, %v392
      %v411 = vpop.permute.xlu0 %410
      %v413 = vadd.f32 %v385, %v396
      %v414 = vadd.f32 %v386, %v401
      %v415 = vadd.f32 %v387, %v406
      %v416 = vadd.f32 %v388, %v411
      %v417 = vmul.f32 %v413, 0.2
      %v418 = vmul.f32 %v414, 0.2
      %v419 = vmul.f32 %v415, 0.2
      %v420 = vmul.f32 %v416, 0.2
      %v421 = vmax.f32 %v413, %v417
      %v422 = vmax.f32 %v414, %v418
      %v423 = vmax.f32 %v415, %v419
      %v424 = vmax.f32 %v416, %v420
      %v425 = vld [vmem:[%s3] sm:$0xff]
      %v426 = vld [vmem:[%s3 + $0x8] sm:$0xff]
      %v427 = vld [vmem:[%s3 + $0x10] sm:$0xff]
      %v428 = vld [vmem:[%s3 + $0x18] sm:$0xff]
      %v429 = vld [vmem:[%s3 + $0x20] sm:$0xff]
      %v430 = vld [vmem:[%s3 + $0x28] sm:$0xff]
      %v431 = vld [vmem:[%s3 + $0x30] sm:$0xff]
      %v432 = vld [vmem:[%s3 + $0x38] sm:$0xff]
      %v433 = vld [vmem:[%s4] sm:$0xff]
      %v434 = vld [vmem:[%s4 + $0x8] sm:$0xff]
      %v435 = vld [vmem:[%s4 + $0x10] sm:$0xff]
      %v436 = vld [vmem:[%s4 + $0x18] sm:$0xff]
      %v437 = vld [vmem:[%s4 + $0x20] sm:$0xff]
      %v438 = vld [vmem:[%s4 + $0x28] sm:$0xff]
      %v439 = vld [vmem:[%s4 + $0x30] sm:$0xff]
      %v440 = vld [vmem:[%s4 + $0x38] sm:$0xff]
      %442 = vset.pattern.permute.xlu0 0
      %443 = vperm.xlu0 %442, %v433
      %v444 = vpop.permute.xlu0 %443
      %447 = vset.pattern.permute.xlu0 0
      %448 = vperm.xlu0 %447, %v434
      %v449 = vpop.permute.xlu0 %448
      %452 = vset.pattern.permute.xlu0 0
      %453 = vperm.xlu0 %452, %v435
      %v454 = vpop.permute.xlu0 %453
      %457 = vset.pattern.permute.xlu0 0
      %458 = vperm.xlu0 %457, %v436
      %v459 = vpop.permute.xlu0 %458
      %462 = vset.pattern.permute.xlu0 0
      %463 = vperm.xlu0 %462, %v437
      %v464 = vpop.permute.xlu0 %463
      %467 = vset.pattern.permute.xlu0 0
      %468 = vperm.xlu0 %467, %v438
      %v469 = vpop.permute.xlu0 %468
      %472 = vset.pattern.permute.xlu0 0
      %473 = vperm.xlu0 %472, %v439
      %v474 = vpop.permute.xlu0 %473
      %477 = vset.pattern.permute.xlu0 0
      %478 = vperm.xlu0 %477, %v440
      %v479 = vpop.permute.xlu0 %478
      %vm481 = vcmask 261120
      %v483 = vsel %vm481, %v425, 0
      %v486 = vsel %vm481, %v426, 0
      %v489 = vsel %vm481, %v427, 0
      %v492 = vsel %vm481, %v428, 0
      %v495 = vsel %vm481, %v429, 0
      %v498 = vsel %vm481, %v430, 0
      %v501 = vsel %vm481, %v431, 0
      %v504 = vsel %vm481, %v432, 0
      %506 = vmatprep.subr.mxu0 0.0
      %507 = vmatpush1.msra.mxu0 0.0
      %508 = vmatprep.subr.mxu0 0.0
      %509 = vmatpush1.msra.mxu0 0.0
      %510 = vmatprep.subr.mxu0 0.0
      %511 = vmatpush1.msra.mxu0 0.0
      %512 = vmatprep.subr.mxu0 0.0
      %513 = vmatpush1.msra.mxu0 0.0
      %514 = vmatprep.subr.mxu0 0.0
      %515 = vmatpush1.msra.mxu0 0.0
      %516 = vmatprep.subr.mxu0 0.0
      %517 = vmatpush1.msra.mxu0 0.0
      %518 = vmatprep.subr.mxu0 0.0
      %519 = vmatpush1.msra.mxu0 0.0
      %520 = vmatprep.subr.mxu0 0.0
      %521 = vmatpush1.msra.mxu0 0.0
      %522 = vmatprep.subr.mxu0 0.0
      %523 = vmatpush1.msra.mxu0 0.0
      %524 = vmatprep.subr.mxu0 0.0
      %525 = vmatpush1.msra.mxu0 0.0
      %526 = vmatprep.subr.mxu0 0.0
      %527 = vmatpush1.msra.mxu0 0.0
      %528 = vmatprep.subr.mxu0 0.0
      %529 = vmatpush1.msra.mxu0 0.0
      %530 = vmatprep.subr.mxu0 0.0
      %531 = vmatpush1.msra.mxu0 %v424
      %532 = vmatprep.subr.mxu0 0.0
      %533 = vmatpush1.msra.mxu0 %v423
      %534 = vmatprep.subr.mxu0 0.0
      %535 = vmatpush1.msra.mxu0 %v422
      %536 = vmatprep.subr.mxu0 0.0
      %537 = vmatpush1.msra.mxu0 %v421
      %538 = vmatprep.subr.mxu0 0.0
      %539 = vmatpush2.msra.mxu0 0.0
      %540 = vmatprep.subr.mxu0 0.0
      %541 = vmatpush2.msra.mxu0 0.0
      %542 = vmatprep.subr.mxu0 0.0
      %543 = vmatpush2.msra.mxu0 0.0
      %544 = vmatprep.subr.mxu0 0.0
      %545 = vmatpush2.msra.mxu0 0.0
      %546 = vmatprep.subr.mxu0 0.0
      %547 = vmatpush2.msra.mxu0 0.0
      %548 = vmatprep.subr.mxu0 0.0
      %549 = vmatpush2.msra.mxu0 0.0
      %550 = vmatprep.subr.mxu0 0.0
      %551 = vmatpush2.msra.mxu0 0.0
      %552 = vmatprep.subr.mxu0 0.0
      %553 = vmatpush2.msra.mxu0 0.0
      %554 = vmatprep.subr.mxu0 0.0
      %555 = vmatpush2.msra.mxu0 0.0
      %556 = vmatprep.subr.mxu0 0.0
      %557 = vmatpush2.msra.mxu0 0.0
      %558 = vmatprep.subr.mxu0 0.0
      %559 = vmatpush2.msra.mxu0 0.0
      %560 = vmatprep.subr.mxu0 0.0
      %561 = vmatpush2.msra.mxu0 0.0
      %562 = vmatprep.subr.mxu0 0.0
      %563 = vmatpush2.msra.mxu0 0.0
      %564 = vmatprep.subr.mxu0 0.0
      %565 = vmatpush2.msra.mxu0 0.0
      %566 = vmatprep.subr.mxu0 0.0
      %567 = vmatpush2.msra.mxu0 0.0
      %568 = vmatprep.subr.mxu0 0.0
      %569 = vmatpush2.msra.mxu0 0.0
      %570 = vmatprep.mubr.f32.mxu0 0.0
      %571 = vmatmul.mubr.f32.gmra.mxu0 %v483
      %v572 = vpop.f32.mrf.mxu0
      %v573 = vadd.f32 %v444, %v572
      %v574 = vpop.f32.mrf.mxu0
      %575 = vmatprep.mubr.f32.mxu0 0.0
      %576 = vmatmul.mubr.f32.gmra.mxu0 %v486
      %v577 = vpop.f32.mrf.mxu0
      %v578 = vadd.f32 %v449, %v577
      %v579 = vpop.f32.mrf.mxu0
      %580 = vmatprep.mubr.f32.mxu0 0.0
      %581 = vmatmul.mubr.f32.gmra.mxu0 %v489
      %v582 = vpop.f32.mrf.mxu0
      %v583 = vadd.f32 %v454, %v582
      %v584 = vpop.f32.mrf.mxu0
      %585 = vmatprep.mubr.f32.mxu0 0.0
      %586 = vmatmul.mubr.f32.gmra.mxu0 %v492
      %v587 = vpop.f32.mrf.mxu0
      %v588 = vadd.f32 %v459, %v587
      %v589 = vpop.f32.mrf.mxu0
      %590 = vmatprep.mubr.f32.mxu0 0.0
      %591 = vmatmul.mubr.f32.gmra.mxu0 %v495
      %v592 = vpop.f32.mrf.mxu0
      %v593 = vadd.f32 %v464, %v592
      %v594 = vpop.f32.mrf.mxu0
      %595 = vmatprep.mubr.f32.mxu0 0.0
      %596 = vmatmul.mubr.f32.gmra.mxu0 %v498
      %v597 = vpop.f32.mrf.mxu0
      %v598 = vadd.f32 %v469, %v597
      %v599 = vpop.f32.mrf.mxu0
      %600 = vmatprep.mubr.f32.mxu0 0.0
      %601 = vmatmul.mubr.f32.gmra.mxu0 %v501
      %v602 = vpop.f32.mrf.mxu0
      %v603 = vadd.f32 %v474, %v602
      %v604 = vpop.f32.mrf.mxu0
      %605 = vmatprep.mubr.f32.mxu0 0.0
      %606 = vmatmul.mubr.f32.gmra.mxu0 %v504
      %v607 = vpop.f32.mrf.mxu0
      %v608 = vadd.f32 %v479, %v607
      %v609 = vpop.f32.mrf.mxu0
      %610 = vdwg.mxu0
      %v611 = vmul.f32 %v573, 0.2
      %v612 = vmul.f32 %v578, 0.2
      %v613 = vmul.f32 %v583, 0.2
      %v614 = vmul.f32 %v588, 0.2
      %v615 = vmul.f32 %v593, 0.2
      %v616 = vmul.f32 %v598, 0.2
      %v617 = vmul.f32 %v603, 0.2
      %v618 = vmul.f32 %v608, 0.2
      %v619 = vmax.f32 %v573, %v611
      %v620 = vmax.f32 %v578, %v612
      %v621 = vmax.f32 %v583, %v613
      %v622 = vmax.f32 %v588, %v614
      %v623 = vmax.f32 %v593, %v615
      %v624 = vmax.f32 %v598, %v616
      %v625 = vmax.f32 %v603, %v617
      %v626 = vmax.f32 %v608, %v618
      %v627 = vld [vmem:[%s5] sm:$0xff]
      %v628 = vld [vmem:[%s5 + $0x8] sm:$0xff]
      %v629 = vld [vmem:[%s5 + $0x10] sm:$0xff]
      %v630 = vld [vmem:[%s5 + $0x18] sm:$0xff]
      %v631 = vld [vmem:[%s6] sm:$0xff]
      %v632 = vld [vmem:[%s6 + $0x8] sm:$0xff]
      %v633 = vld [vmem:[%s6 + $0x10] sm:$0xff]
      %v634 = vld [vmem:[%s6 + $0x18] sm:$0xff]
      %636 = vset.pattern.permute.xlu0 0
      %637 = vperm.xlu0 %636, %v631
      %v638 = vpop.permute.xlu0 %637
      %641 = vset.pattern.permute.xlu0 0
      %642 = vperm.xlu0 %641, %v632
      %v643 = vpop.permute.xlu0 %642
      %646 = vset.pattern.permute.xlu0 0
      %647 = vperm.xlu0 %646, %v633
      %v648 = vpop.permute.xlu0 %647
      %651 = vset.pattern.permute.xlu0 0
      %652 = vperm.xlu0 %651, %v634
      %v653 = vpop.permute.xlu0 %652
      %vm655 = vcmask 523264
      %v657 = vsel %vm655, %v627, 0
      %v660 = vsel %vm655, %v628, 0
      %v663 = vsel %vm655, %v629, 0
      %v666 = vsel %vm655, %v630, 0
      %668 = vmatprep.subr.mxu0 0.0
      %669 = vmatpush1.msra.mxu0 0.0
      %670 = vmatprep.subr.mxu0 0.0
      %671 = vmatpush1.msra.mxu0 0.0
      %672 = vmatprep.subr.mxu0 0.0
      %673 = vmatpush1.msra.mxu0 0.0
      %674 = vmatprep.subr.mxu0 0.0
      %675 = vmatpush1.msra.mxu0 0.0
      %676 = vmatprep.subr.mxu0 0.0
      %677 = vmatpush1.msra.mxu0 0.0
      %678 = vmatprep.subr.mxu0 0.0
      %679 = vmatpush1.msra.mxu0 0.0
      %680 = vmatprep.subr.mxu0 0.0
      %681 = vmatpush1.msra.mxu0 0.0
      %682 = vmatprep.subr.mxu0 0.0
      %683 = vmatpush1.msra.mxu0 0.0
      %684 = vmatprep.subr.mxu0 0.0
      %685 = vmatpush1.msra.mxu0 %v626
      %686 = vmatprep.subr.mxu0 0.0
      %687 = vmatpush1.msra.mxu0 %v625
      %688 = vmatprep.subr.mxu0 0.0
      %689 = vmatpush1.msra.mxu0 %v624
      %690 = vmatprep.subr.mxu0 0.0
      %691 = vmatpush1.msra.mxu0 %v623
      %692 = vmatprep.subr.mxu0 0.0
      %693 = vmatpush1.msra.mxu0 %v622
      %694 = vmatprep.subr.mxu0 0.0
      %695 = vmatpush1.msra.mxu0 %v621
      %696 = vmatprep.subr.mxu0 0.0
      %697 = vmatpush1.msra.mxu0 %v620
      %698 = vmatprep.subr.mxu0 0.0
      %699 = vmatpush1.msra.mxu0 %v619
      %700 = vmatprep.subr.mxu0 0.0
      %701 = vmatpush2.msra.mxu0 0.0
      %702 = vmatprep.subr.mxu0 0.0
      %703 = vmatpush2.msra.mxu0 0.0
      %704 = vmatprep.subr.mxu0 0.0
      %705 = vmatpush2.msra.mxu0 0.0
      %706 = vmatprep.subr.mxu0 0.0
      %707 = vmatpush2.msra.mxu0 0.0
      %708 = vmatprep.subr.mxu0 0.0
      %709 = vmatpush2.msra.mxu0 0.0
      %710 = vmatprep.subr.mxu0 0.0
      %711 = vmatpush2.msra.mxu0 0.0
      %712 = vmatprep.subr.mxu0 0.0
      %713 = vmatpush2.msra.mxu0 0.0
      %714 = vmatprep.subr.mxu0 0.0
      %715 = vmatpush2.msra.mxu0 0.0
      %716 = vmatprep.subr.mxu0 0.0
      %717 = vmatpush2.msra.mxu0 0.0
      %718 = vmatprep.subr.mxu0 0.0
      %719 = vmatpush2.msra.mxu0 0.0
      %720 = vmatprep.subr.mxu0 0.0
      %721 = vmatpush2.msra.mxu0 0.0
      %722 = vmatprep.subr.mxu0 0.0
      %723 = vmatpush2.msra.mxu0 0.0
      %724 = vmatprep.subr.mxu0 0.0
      %725 = vmatpush2.msra.mxu0 0.0
      %726 = vmatprep.subr.mxu0 0.0
      %727 = vmatpush2.msra.mxu0 0.0
      %728 = vmatprep.subr.mxu0 0.0
      %729 = vmatpush2.msra.mxu0 0.0
      %730 = vmatprep.subr.mxu0 0.0
      %731 = vmatpush2.msra.mxu0 0.0
      %732 = vmatprep.mubr.f32.mxu0 0.0
      %733 = vmatmul.mubr.f32.gmra.mxu0 %v657
      %v734 = vpop.f32.mrf.mxu0
      %v735 = vadd.f32 %v638, %v734
      %v736 = vpop.f32.mrf.mxu0
      %737 = vmatprep.mubr.f32.mxu0 0.0
      %738 = vmatmul.mubr.f32.gmra.mxu0 %v660
      %v739 = vpop.f32.mrf.mxu0
      %v740 = vadd.f32 %v643, %v739
      %v741 = vpop.f32.mrf.mxu0
      %742 = vmatprep.mubr.f32.mxu0 0.0
      %743 = vmatmul.mubr.f32.gmra.mxu0 %v663
      %v744 = vpop.f32.mrf.mxu0
      %v745 = vadd.f32 %v648, %v744
      %v746 = vpop.f32.mrf.mxu0
      %747 = vmatprep.mubr.f32.mxu0 0.0
      %748 = vmatmul.mubr.f32.gmra.mxu0 %v666
      %v749 = vpop.f32.mrf.mxu0
      %v750 = vadd.f32 %v653, %v749
      %v751 = vpop.f32.mrf.mxu0
      %752 = vdwg.mxu0
      %v753 = vmul.f32 %v735, 0.2
      %v754 = vmul.f32 %v740, 0.2
      %v755 = vmul.f32 %v745, 0.2
      %v756 = vmul.f32 %v750, 0.2
      %v757 = vmax.f32 %v735, %v753
      %v758 = vmax.f32 %v740, %v754
      %v759 = vmax.f32 %v745, %v755
      %v760 = vmax.f32 %v750, %v756
      %v761 = vld [vmem:[%s7] sm:$0x1]
      %v762 = vld [vmem:[#allocation2] sm:$0x1]
      %764 = vset.pattern.permute.xlu0 0
      %765 = vperm.xlu0 %764, %v762
      %v766 = vpop.permute.xlu0 %765
      %v768 = vlaneseq
      %v769 = vshrl.u32 %v768, 7
      %v770 = vsub.s32 0, %v769
      %v771 = vrot.slane %v766, %v770
      %v773 = vsel %vm481, %v761, 0
      %775 = vmatprep.subr.mxu0 0.0
      %776 = vmatpush1.msra.mxu0 0.0
      %777 = vmatprep.subr.mxu0 0.0
      %778 = vmatpush1.msra.mxu0 0.0
      %779 = vmatprep.subr.mxu0 0.0
      %780 = vmatpush1.msra.mxu0 0.0
      %781 = vmatprep.subr.mxu0 0.0
      %782 = vmatpush1.msra.mxu0 0.0
      %783 = vmatprep.subr.mxu0 0.0
      %784 = vmatpush1.msra.mxu0 0.0
      %785 = vmatprep.subr.mxu0 0.0
      %786 = vmatpush1.msra.mxu0 0.0
      %787 = vmatprep.subr.mxu0 0.0
      %788 = vmatpush1.msra.mxu0 0.0
      %789 = vmatprep.subr.mxu0 0.0
      %790 = vmatpush1.msra.mxu0 0.0
      %791 = vmatprep.subr.mxu0 0.0
      %792 = vmatpush1.msra.mxu0 0.0
      %793 = vmatprep.subr.mxu0 0.0
      %794 = vmatpush1.msra.mxu0 0.0
      %795 = vmatprep.subr.mxu0 0.0
      %796 = vmatpush1.msra.mxu0 0.0
      %797 = vmatprep.subr.mxu0 0.0
      %798 = vmatpush1.msra.mxu0 0.0
      %799 = vmatprep.subr.mxu0 0.0
      %800 = vmatpush1.msra.mxu0 %v760
      %801 = vmatprep.subr.mxu0 0.0
      %802 = vmatpush1.msra.mxu0 %v759
      %803 = vmatprep.subr.mxu0 0.0
      %804 = vmatpush1.msra.mxu0 %v758
      %805 = vmatprep.subr.mxu0 0.0
      %806 = vmatpush1.msra.mxu0 %v757
      %807 = vmatprep.subr.mxu0 0.0
      %808 = vmatpush2.msra.mxu0 0.0
      %809 = vmatprep.subr.mxu0 0.0
      %810 = vmatpush2.msra.mxu0 0.0
      %811 = vmatprep.subr.mxu0 0.0
      %812 = vmatpush2.msra.mxu0 0.0
      %813 = vmatprep.subr.mxu0 0.0
      %814 = vmatpush2.msra.mxu0 0.0
      %815 = vmatprep.subr.mxu0 0.0
      %816 = vmatpush2.msra.mxu0 0.0
      %817 = vmatprep.subr.mxu0 0.0
      %818 = vmatpush2.msra.mxu0 0.0
      %819 = vmatprep.subr.mxu0 0.0
      %820 = vmatpush2.msra.mxu0 0.0
      %821 = vmatprep.subr.mxu0 0.0
      %822 = vmatpush2.msra.mxu0 0.0
      %823 = vmatprep.subr.mxu0 0.0
      %824 = vmatpush2.msra.mxu0 0.0
      %825 = vmatprep.subr.mxu0 0.0
      %826 = vmatpush2.msra.mxu0 0.0
      %827 = vmatprep.subr.mxu0 0.0
      %828 = vmatpush2.msra.mxu0 0.0
      %829 = vmatprep.subr.mxu0 0.0
      %830 = vmatpush2.msra.mxu0 0.0
      %831 = vmatprep.subr.mxu0 0.0
      %832 = vmatpush2.msra.mxu0 0.0
      %833 = vmatprep.subr.mxu0 0.0
      %834 = vmatpush2.msra.mxu0 0.0
      %835 = vmatprep.subr.mxu0 0.0
      %836 = vmatpush2.msra.mxu0 0.0
      %837 = vmatprep.subr.mxu0 0.0
      %838 = vmatpush2.msra.mxu0 0.0
      %839 = vmatprep.mubr.f32.mxu0 0.0
      %840 = vmatmul.mubr.f32.gmra.mxu0 %v773
      %v841 = vpop.f32.mrf.mxu0
      %v842 = vadd.f32 %v771, %v841
      %v843 = vpop.f32.mrf.mxu0
      %844 = vdwg.mxu0
      %v845 = vxor.u32 %v842, 2147483648
      %v846 = vmul.f32 %v845, 1.442695
      %v847 = vpow.pop %v846
      %v848 = vadd.f32 %v847, 1.0
      %v849 = vrcp.pop %v848
      %v850 = vmul.f32 1.0, %v849
      %851 = vst [vmem:[%s327] sm:$0x1] %v850
      %p852 = scmp.lt.s32.totalorder %s22, 2
      %s853 = scalar_select %p852, %s22, 2
      %s854 = scalar_lea.vmem %s9, %s853
      // Predicated region
      $region57: #{_discriminator_forward.1} parent=55 // pred_check
        %p855 = pneg %p234
      $region58: #{_discriminator_forward.1} parent=55 // pred_check_branch
        %857 = sbr.rel (%p855) target = $region60
      $region59: #{_discriminator_forward.1} parent=55 // pred_region
        _
      $region60: #{_discriminator_forward.1} parent=55 // pred_fallthru
        _
    $region56: #{_discriminator_forward.1} parent=5 // pred_fallthru
      _
    %p858 = scmp.le.s32.totalorder 2, %s17
    // Predicated region
    $region61: #{_discriminator_forward.1} parent=5 // pred_check
      %p859 = pneg %p858
    $region62: #{_discriminator_forward.1} parent=5 // pred_check_branch
      %861 = sbr.rel (%p859) target = $region64
    $region63: #{_discriminator_forward.1} parent=5 // pred_region
      %s862 = ssub.s32 %s17, 2
      // Predicated region
      $region65: #{_discriminator_forward.1} parent=63 // pred_check
        %p863 = pneg %p240
      $region66: #{_discriminator_forward.1} parent=63 // pred_check_branch
        %865 = sbr.rel (%p863) target = $region68
      $region67: #{_discriminator_forward.1} parent=63 // pred_region
        %p866 = scmp.lt.s32.totalorder %s23, 2
        %s867 = scalar_select %p866, %s23, 2
        %s868 = scalar_lea.vmem %s9, %s867
      $region68: #{_discriminator_forward.1} parent=63 // pred_fallthru
        _
    $region64: #{_discriminator_forward.1} parent=5 // pred_fallthru
      _
  $region6: #{_discriminator_forward.1} parent=0 // loop_footer
    %s21 = sadd.s32 1, %s17
  $region7: #{_discriminator_forward.1} parent=0 // loop_footer_branch
    %16 = sbr.rel target = $region3
  $region8: #{_discriminator_forward.1} parent=0 // loop_exit
    _

</llo_original>
